<compile_context>
chip_gen: v6e
topology: v6e:2x2x1
jax: 0.10.0
libtpu: 0.0.40
codegen_flags: <defaults>
</compile_context>

<pallas_src>
import functools
import math

import jax
import jax.numpy as jnp
from jax.experimental import pallas as pl
from jax.experimental.pallas import tpu as pltpu

D_K = 64              # module-level d_k in WikiGPT.py (scale constant)
MASK_FILL = -1e9
LN = None             # unused; kept name-free


def _sdpa_kernel(q_ref, k_ref, v_ref, m_ref, ctx_ref, w_ref, *, scale):
    # q: (1, TQ, Dk)  k: (1, Sk, Dk)  v: (1, Sk, Dv)  m: (1, TQ, Sk) int32
    q = q_ref[0]
    k = k_ref[0]
    v = v_ref[0]

    # scores = Q @ K^T / sqrt(d_k)  -- bf16 operands, f32 accumulation (MXU).
    scores = jax.lax.dot_general(
        q.astype(jnp.bfloat16), k.astype(jnp.bfloat16),
        dimension_numbers=(((1,), (1,)), ((), ())),
        preferred_element_type=jnp.float32) * scale

    # masked_fill_(attn_mask, -1e9)
    scores = jnp.where(m_ref[0] != 0, MASK_FILL, scores)

    # numerically-stable softmax over the key axis (f32)
    m = jnp.max(scores, axis=-1, keepdims=True)
    e = jnp.exp(scores - m)
    denom = jnp.sum(e, axis=-1, keepdims=True)
    w = e * pl.reciprocal(denom, approx=True)

    # context = weights @ V  -- bf16 operands, f32 accumulation.
    ctx = jnp.dot(w.astype(jnp.bfloat16), v.astype(jnp.bfloat16),
                  preferred_element_type=jnp.float32)

    w_ref[0] = w.astype(w_ref.dtype)
    ctx_ref[0] = ctx.astype(ctx_ref.dtype)


def _pick_block(n, candidates=(256, 128, 64, 32, 16, 8)):
    for c in candidates:
        if c <= n and n % c == 0:
            return c
    return n  # full extent (always legal as a block dim)


@jax.jit
def scaled_dot_product_attention(Q, K, V, attn_mask):
    """Q,K: (B,H,Sq,Dk)/(B,H,Sk,Dk), V: (B,H,Sk,Dv), attn_mask: (B,H,Sq,Sk) bool.

    Returns (context (B,H,Sq,Dv), weights (B,H,Sq,Sk)), matching the PyTorch
    module's forward.
    """
    B, H, Sq, Dk = Q.shape
    Sk = K.shape[2]
    Dv = V.shape[3]
    BH = B * H

    q = Q.reshape(BH, Sq, Dk)
    k = K.reshape(BH, Sk, Dk)
    v = V.reshape(BH, Sk, Dv)
    mask = attn_mask.reshape(BH, Sq, Sk).astype(jnp.int32)

    block_q = _pick_block(Sq)
    n_q = Sq // block_q
    scale = 1.0 / math.sqrt(D_K)  # module divides by np.sqrt(d_k) with d_k=64

    kernel = functools.partial(_sdpa_kernel, scale=scale)

    flops = 2 * BH * Sq * Sk * (Dk + Dv)
    bytes_accessed = 4 * (q.size + k.size + v.size + mask.size
                          + BH * Sq * Dv + BH * Sq * Sk)
    cost = pl.CostEstimate(flops=flops,
                           transcendentals=BH * Sq * Sk,
                           bytes_accessed=bytes_accessed)

    ctx, w = pl.pallas_call(
        kernel,
        out_shape=(jax.ShapeDtypeStruct((BH, Sq, Dv), Q.dtype),
                   jax.ShapeDtypeStruct((BH, Sq, Sk), Q.dtype)),
        grid_spec=pltpu.PrefetchScalarGridSpec(
            num_scalar_prefetch=0,
            grid=(BH, n_q),
            in_specs=[
                pl.BlockSpec((1, block_q, Dk), lambda b, i: (b, i, 0)),  # Q tile
                pl.BlockSpec((1, Sk, Dk),      lambda b, i: (b, 0, 0)),  # K (resident per b)
                pl.BlockSpec((1, Sk, Dv),      lambda b, i: (b, 0, 0)),  # V (resident per b)
                pl.BlockSpec((1, block_q, Sk), lambda b, i: (b, i, 0)),  # mask tile
            ],
            out_specs=[
                pl.BlockSpec((1, block_q, Dv), lambda b, i: (b, i, 0)),  # context
                pl.BlockSpec((1, block_q, Sk), lambda b, i: (b, i, 0)),  # weights
            ],
        ),
        compiler_params=pltpu.CompilerParams(
            dimension_semantics=("parallel", "parallel"),
            vmem_limit_bytes=64 * 1024 * 1024,
        ),
        cost_estimate=cost,
    )(q, k, v, mask)

    return ctx.reshape(B, H, Sq, Dv), w.reshape(B, H, Sq, Sk)


def _reference(Q, K, V, attn_mask):
    scale = 1.0 / math.sqrt(D_K)
    scores = jnp.einsum("bhqd,bhkd->bhqk", Q.astype(jnp.float32),
                        K.astype(jnp.float32)) * scale
    scores = jnp.where(attn_mask, MASK_FILL, scores)
    weights = jax.nn.softmax(scores, axis=-1)
    context = jnp.einsum("bhqk,bhkd->bhqd", weights, V.astype(jnp.float32))
    return context, weights


if __name__ == "__main__":
    key = jax.random.PRNGKey(0)
    kq, kk, kv = jax.random.split(key, 3)

    B, H, S = 2, 2, 128  # small batch/heads/seq; d_k fixed at 64 by the module

    Q = jax.random.normal(kq, (B, H, S, D_K), dtype=jnp.float32)
    K = jax.random.normal(kk, (B, H, S, D_K), dtype=jnp.float32)
    V = jax.random.normal(kv, (B, H, S, D_K), dtype=jnp.float32)

    # Causal mask (True = masked), broadcast over batch and heads.
    causal = jnp.arange(S)[None, :] > jnp.arange(S)[:, None]
    attn_mask = jnp.broadcast_to(causal, (B, H, S, S))

    ctx, w = scaled_dot_product_attention(Q, K, V, attn_mask)
    ctx = jax.block_until_ready(ctx)
    w = jax.block_until_ready(w)

    ref_ctx, ref_w = _reference(Q, K, V, attn_mask)
    assert ctx.shape == (B, H, S, D_K)
    assert w.shape == (B, H, S, S)
    # bf16 matmul operands with f32 accumulation -> loosen tolerance vs f32 ref.
    assert jnp.allclose(w, ref_w, rtol=2e-2, atol=2e-2)
    assert jnp.allclose(ctx, ref_ctx, rtol=2e-2, atol=2e-2)

    print("KERNEL_OK")
</pallas_src>

<mosaic_0001>
module attributes {stable_mosaic.version = 11 : i64} {
  func.func @_sdpa_kernel(%arg0: i32, %arg1: i32, %arg2: memref<1x128x64xf32, #tpu.memory_space<vmem>>, %arg3: memref<1x128x64xf32, #tpu.memory_space<vmem>>, %arg4: memref<1x128x64xf32, #tpu.memory_space<vmem>>, %arg5: memref<1x128x128xi32, #tpu.memory_space<vmem>>, %arg6: memref<1x128x64xf32, #tpu.memory_space<vmem>>, %arg7: memref<1x128x128xf32, #tpu.memory_space<vmem>>) attributes {dimension_semantics = [#tpu.dimension_semantics<parallel>, #tpu.dimension_semantics<parallel>], iteration_bounds = array<i64: 4, 1>, scalar_prefetch = 0 : i64, scratch_operands = 0 : i64, tpu.core_type = #tpu.core_type<tc>, window_params = [{transform_indices = @transform_0, window_bounds = array<i64: 1, 128, 64>}, {transform_indices = @transform_1, window_bounds = array<i64: 1, 128, 64>}, {transform_indices = @transform_2, window_bounds = array<i64: 1, 128, 64>}, {transform_indices = @transform_3, window_bounds = array<i64: 1, 128, 128>}, {transform_indices = @transform_4, window_bounds = array<i64: 1, 128, 64>}, {transform_indices = @transform_5, window_bounds = array<i64: 1, 128, 128>}]} {
    %c0 = arith.constant 0 : index
    %c0_0 = arith.constant 0 : index
    %c0_1 = arith.constant 0 : index
    %0 = vector.load %arg2[%c0, %c0_0, %c0_1] : memref<1x128x64xf32, #tpu.memory_space<vmem>>, vector<1x128x64xf32>
    %1 = vector.shape_cast %0 : vector<1x128x64xf32> to vector<128x64xf32>
    %c0_2 = arith.constant 0 : index
    %c0_3 = arith.constant 0 : index
    %c0_4 = arith.constant 0 : index
    %2 = vector.load %arg3[%c0_2, %c0_3, %c0_4] : memref<1x128x64xf32, #tpu.memory_space<vmem>>, vector<1x128x64xf32>
    %3 = vector.shape_cast %2 : vector<1x128x64xf32> to vector<128x64xf32>
    %c0_5 = arith.constant 0 : index
    %c0_6 = arith.constant 0 : index
    %c0_7 = arith.constant 0 : index
    %4 = vector.load %arg4[%c0_5, %c0_6, %c0_7] : memref<1x128x64xf32, #tpu.memory_space<vmem>>, vector<1x128x64xf32>
    %5 = vector.shape_cast %4 : vector<1x128x64xf32> to vector<128x64xf32>
    %6 = arith.truncf %1 : vector<128x64xf32> to vector<128x64xbf16>
    %7 = arith.truncf %3 : vector<128x64xf32> to vector<128x64xbf16>
    %cst = arith.constant dense<0.000000e+00> : vector<128x128xf32>
    %8 = tpu.matmul %6, %7, %cst {dimension_numbers = #tpu.dot_dimension_numbers<[1], [1], [0], [0], [0, 0, 1, 0], [], []>} : vector<128x64xbf16>, vector<128x64xbf16>, vector<128x128xf32> -> vector<128x128xf32>
    %cst_8 = arith.constant 1.250000e-01 : f32
    %9 = vector.broadcast %cst_8 : f32 to vector<128x128xf32>
    %10 = arith.mulf %8, %9 : vector<128x128xf32>
    %c0_9 = arith.constant 0 : index
    %c0_10 = arith.constant 0 : index
    %c0_11 = arith.constant 0 : index
    %11 = vector.load %arg5[%c0_9, %c0_10, %c0_11] : memref<1x128x128xi32, #tpu.memory_space<vmem>>, vector<1x128x128xi32>
    %12 = vector.shape_cast %11 : vector<1x128x128xi32> to vector<128x128xi32>
    %c0_i32 = arith.constant 0 : i32
    %13 = vector.broadcast %c0_i32 : i32 to vector<128x128xi32>
    %14 = arith.cmpi ne, %12, %13 : vector<128x128xi32>
    %cst_12 = arith.constant -1.000000e+09 : f32
    %15 = vector.broadcast %cst_12 : f32 to vector<128x128xf32>
    %16 = arith.select %14, %15, %10 : vector<128x128xi1>, vector<128x128xf32>
    %cst_13 = arith.constant dense<0xFF800000> : vector<128xf32>
    %17 = vector.multi_reduction <maximumf>, %16, %cst_13 [1] : vector<128x128xf32> to vector<128xf32>
    %18 = vector.shape_cast %17 : vector<128xf32> to vector<128x1xf32>
    %19 = vector.broadcast %18 : vector<128x1xf32> to vector<128x128xf32>
    %20 = arith.subf %16, %19 : vector<128x128xf32>
    %21 = math.exp %20 : vector<128x128xf32>
    %cst_14 = arith.constant dense<0.000000e+00> : vector<128xf32>
    %22 = vector.multi_reduction <add>, %21, %cst_14 [1] : vector<128x128xf32> to vector<128xf32>
    %23 = vector.shape_cast %22 : vector<128xf32> to vector<128x1xf32>
    %24 = tpu.reciprocal %23 {approx = true} : vector<128x1xf32> -> vector<128x1xf32>
    %25 = vector.broadcast %24 : vector<128x1xf32> to vector<128x128xf32>
    %26 = arith.mulf %21, %25 : vector<128x128xf32>
    %27 = arith.truncf %26 : vector<128x128xf32> to vector<128x128xbf16>
    %28 = arith.truncf %5 : vector<128x64xf32> to vector<128x64xbf16>
    %cst_15 = arith.constant dense<0.000000e+00> : vector<128x64xf32>
    %29 = tpu.matmul %27, %28, %cst_15 {dimension_numbers = #tpu.dot_dimension_numbers<[1], [0], [0], [1], [0, 0, 1, 1], [], []>} : vector<128x128xbf16>, vector<128x64xbf16>, vector<128x64xf32> -> vector<128x64xf32>
    %c0_16 = arith.constant 0 : index
    %c0_17 = arith.constant 0 : index
    %c0_18 = arith.constant 0 : index
    %30 = vector.load %arg7[%c0_16, %c0_17, %c0_18] : memref<1x128x128xf32, #tpu.memory_space<vmem>>, vector<1x128x128xf32>
    %31 = vector.shape_cast %30 : vector<1x128x128xf32> to vector<128x128xf32>
    %32 = vector.shape_cast %26 : vector<128x128xf32> to vector<1x128x128xf32>
    tpu.vector_store %arg7[%c0_16, %c0_17, %c0_18], %32 {strides = array<i32>} : memref<1x128x128xf32, #tpu.memory_space<vmem>>, vector<1x128x128xf32>,
    %c0_19 = arith.constant 0 : index
    %c0_20 = arith.constant 0 : index
    %c0_21 = arith.constant 0 : index
    %33 = vector.load %arg6[%c0_19, %c0_20, %c0_21] : memref<1x128x64xf32, #tpu.memory_space<vmem>>, vector<1x128x64xf32>
    %34 = vector.shape_cast %33 : vector<1x128x64xf32> to vector<128x64xf32>
    %35 = vector.shape_cast %29 : vector<128x64xf32> to vector<1x128x64xf32>
    tpu.vector_store %arg6[%c0_19, %c0_20, %c0_21], %35 {strides = array<i32>} : memref<1x128x64xf32, #tpu.memory_space<vmem>>, vector<1x128x64xf32>,
    return
  }
  func.func @transform_0(%arg0: i32, %arg1: i32) -> (i32, i32, i32) {
    %c0_i32 = arith.constant 0 : i32
    %c0_i32_0 = arith.constant 0 : i32
    return %arg0, %arg1, %c0_i32 : i32, i32, i32
  }
  func.func @transform_1(%arg0: i32, %arg1: i32) -> (i32, i32, i32) {
    %c0_i32 = arith.constant 0 : i32
    %c0_i32_0 = arith.constant 0 : i32
    %c0_i32_1 = arith.constant 0 : i32
    return %arg0, %c0_i32, %c0_i32_0 : i32, i32, i32
  }
  func.func @transform_2(%arg0: i32, %arg1: i32) -> (i32, i32, i32) {
    %c0_i32 = arith.constant 0 : i32
    %c0_i32_0 = arith.constant 0 : i32
    %c0_i32_1 = arith.constant 0 : i32
    return %arg0, %c0_i32, %c0_i32_0 : i32, i32, i32
  }
  func.func @transform_3(%arg0: i32, %arg1: i32) -> (i32, i32, i32) {
    %c0_i32 = arith.constant 0 : i32
    %c0_i32_0 = arith.constant 0 : i32
    return %arg0, %arg1, %c0_i32 : i32, i32, i32
  }
  func.func @transform_4(%arg0: i32, %arg1: i32) -> (i32, i32, i32) {
    %c0_i32 = arith.constant 0 : i32
    %c0_i32_0 = arith.constant 0 : i32
    return %arg0, %arg1, %c0_i32 : i32, i32, i32
  }
  func.func @transform_5(%arg0: i32, %arg1: i32) -> (i32, i32, i32) {
    %c0_i32 = arith.constant 0 : i32
    %c0_i32_0 = arith.constant 0 : i32
    return %arg0, %arg1, %c0_i32 : i32, i32, i32
  }
}

</mosaic_0001>

<llo_original>
// kernel: scaled_dot_product_attention.1
$region0: #{scaled_dot_product_attention.1}
  #allocation0 [shape = 'u32[]', space=smem, size = 0x4, offset = 0x4, fixed_abs, tag = 'smem constant byte address 0x4 - core index']
  #allocation1 [shape = 'u32[144,128]{1,0:T(1,128)}', space=vmem, size = 0x12000, scoped, tag = 'internal scratch']
  %s0 = inlined_call_operand.vmem [shape: f32[4,128,64], index: 0, kind: input, shape index: {}]
  %s1 = inlined_call_operand.vmem [shape: f32[4,128,64], index: 1, kind: input, shape index: {}]
  %s2 = inlined_call_operand.vmem [shape: f32[4,128,64], index: 2, kind: input, shape index: {}]
  %s3 = inlined_call_operand.vmem [shape: s32[4,128,128], index: 3, kind: input, shape index: {}]
  %s4 = inlined_call_operand.vmem [shape: f32[4,128,64], index: 4, kind: output, shape index: {0}]
  %s5 = inlined_call_operand.hbm [shape: f32[4,128,128], index: 5, kind: output, shape index: {1}]
  %6 = xla_tuple %s4, %s5
  %s7 = sld [smem:[#allocation0]]
  $region57: #{scaled_dot_product_attention.1} parent=0
    _
  %s9 = ssub.s32 1, %s7
  %s10 = scalar_select 0, %s9, %s7
  $region1: #{scaled_dot_product_attention.1} parent=0
    #allocation2 [shape = 'u8[131072]{0}', space=vmem, size = 0x20000, scoped, tag = 'output window, operand 1']
    #allocation3 [shape = 's32[2]{0}', space=sflag, size = 0x8, scoped, tag = 'scoped memory for scaled_dot_product_attention.1']
    %11 = vsyncpa [#allocation3], 0
    %s12 = scalar_lea.sflag [#allocation3], 1
    %13 = vsyncpa %s12, 0
    loop: start=0, step=1, limit=6
    $region2: #{scaled_dot_product_attention.1} parent=1 // loop_pre_header
      _
    $region3: #{scaled_dot_product_attention.1} parent=1 // loop_header
      %s15 = sphi 0, %s19
      %p16 = scmp.ge.s32.totalorder %s15, 6
      %s22 = sphi 0, %s34
      %s23 = sphi 0, %s30
      %s24 = sphi 0, %s22
      %s25 = sphi 0, %s23
      %s26 = sphi 0, %s24
      %s27 = sphi 0, %s25
      %s39 = sphi 0, %s41
      %s42 = sphi 0, %s39
      %s43 = sphi 0, %s42
      %s59 = sphi 0, %s43
      %s65 = sphi 0, %s67
      %s68 = sphi 0, %s65
      %s69 = sphi 0, %s68
      %s85 = sphi 0, %s69
      %s91 = sphi 0, %s93
      %s94 = sphi 0, %s91
      %s95 = sphi 0, %s94
      %s111 = sphi 0, %s95
      %s119 = sphi 0, %s121
      %s122 = sphi 0, %s119
      %s123 = sphi 0, %s122
      %s139 = sphi 0, %s123
      %s147 = sphi 0, %s149
      %s150 = sphi 0, %s147
      %s151 = sphi 0, %s150
      %s167 = sphi 0, %s151
      %s175 = sphi 0, %s177
      %s178 = sphi 0, %s175
      %s179 = sphi 0, %s178
      %s195 = sphi 0, %s179
    $region4: #{scaled_dot_product_attention.1} parent=1 // loop_header_branch
      %18 = sbr.rel (%p16) target = $region8
    $region5: #{scaled_dot_product_attention.1} parent=1 // loop_body
      %s20 = ssub.s32 %s15, 1
      %s21 = ssub.s32 %s15, 2
      %s28 = sadd.s32 1, %s23
      %p29 = scmp.ge.s32.totalorder %s28, 1
      %s30 = scalar_select %p29, 0, %s28
      %s31 = sadd.s32 1, %s22
      %s32 = scalar_select %p29, %s31, %s22
      %p33 = scmp.ge.s32.totalorder %s32, 4
      %s34 = scalar_select %p33, 0, %s32
      %s35 = ssub.s32 %s22, %s34
      %s36 = ssub.s32 %s23, %s30
      %s37 = sor.u32 %s35, %s36
      %p38 = scmp.eq.s32.totalorder %s37, 0
      %s40 = sadd.s32 %s39, 1
      %s41 = scalar_select %p38, %s39, %s40
      %p44 = pneg %p38
      %p45 = scmp.eq.s32.totalorder %s15, 3
      %p46 = por %p44, %p45
      %p47 = scmp.ne.s32.totalorder %s39, %s42
      %p48 = scmp.eq.s32.totalorder %s15, 0
      %p49 = por %p47, %p48
      %p50 = scmp.ne.s32.totalorder %s39, %s42
      %p51 = scmp.eq.s32.totalorder %s20, 3
      %p52 = por %p50, %p51
      %p53 = scmp.ne.s32.totalorder %s42, %s43
      %p54 = scmp.eq.s32.totalorder %s20, 0
      %p55 = por %p53, %p54
      %p56 = scmp.ne.s32.totalorder %s42, %s43
      %p57 = scmp.eq.s32.totalorder %s21, 3
      %p58 = por %p56, %p57
      %p60 = scmp.ne.s32.totalorder %s43, %s59
      %p61 = scmp.eq.s32.totalorder %s21, 0
      %p62 = por %p60, %p61
      %s63 = ssub.s32 %s22, %s34
      %p64 = scmp.eq.s32.totalorder %s63, 0
      %s66 = sadd.s32 %s65, 1
      %s67 = scalar_select %p64, %s65, %s66
      %p70 = pneg %p64
      %p71 = scmp.eq.s32.totalorder %s15, 3
      %p72 = por %p70, %p71
      %p73 = scmp.ne.s32.totalorder %s65, %s68
      %p74 = scmp.eq.s32.totalorder %s15, 0
      %p75 = por %p73, %p74
      %p76 = scmp.ne.s32.totalorder %s65, %s68
      %p77 = scmp.eq.s32.totalorder %s20, 3
      %p78 = por %p76, %p77
      %p79 = scmp.ne.s32.totalorder %s68, %s69
      %p80 = scmp.eq.s32.totalorder %s20, 0
      %p81 = por %p79, %p80
      %p82 = scmp.ne.s32.totalorder %s68, %s69
      %p83 = scmp.eq.s32.totalorder %s21, 3
      %p84 = por %p82, %p83
      %p86 = scmp.ne.s32.totalorder %s69, %s85
      %p87 = scmp.eq.s32.totalorder %s21, 0
      %p88 = por %p86, %p87
      %s89 = ssub.s32 %s22, %s34
      %p90 = scmp.eq.s32.totalorder %s89, 0
      %s92 = sadd.s32 %s91, 1
      %s93 = scalar_select %p90, %s91, %s92
      %p96 = pneg %p90
      %p97 = scmp.eq.s32.totalorder %s15, 3
      %p98 = por %p96, %p97
      %p99 = scmp.ne.s32.totalorder %s91, %s94
      %p100 = scmp.eq.s32.totalorder %s15, 0
      %p101 = por %p99, %p100
      %p102 = scmp.ne.s32.totalorder %s91, %s94
      %p103 = scmp.eq.s32.totalorder %s20, 3
      %p104 = por %p102, %p103
      %p105 = scmp.ne.s32.totalorder %s94, %s95
      %p106 = scmp.eq.s32.totalorder %s20, 0
      %p107 = por %p105, %p106
      %p108 = scmp.ne.s32.totalorder %s94, %s95
      %p109 = scmp.eq.s32.totalorder %s21, 3
      %p110 = por %p108, %p109
      %p112 = scmp.ne.s32.totalorder %s95, %s111
      %p113 = scmp.eq.s32.totalorder %s21, 0
      %p114 = por %p112, %p113
      %s115 = ssub.s32 %s22, %s34
      %s116 = ssub.s32 %s23, %s30
      %s117 = sor.u32 %s115, %s116
      %p118 = scmp.eq.s32.totalorder %s117, 0
      %s120 = sadd.s32 %s119, 1
      %s121 = scalar_select %p118, %s119, %s120
      %p124 = pneg %p118
      %p125 = scmp.eq.s32.totalorder %s15, 3
      %p126 = por %p124, %p125
      %p127 = scmp.ne.s32.totalorder %s119, %s122
      %p128 = scmp.eq.s32.totalorder %s15, 0
      %p129 = por %p127, %p128
      %p130 = scmp.ne.s32.totalorder %s119, %s122
      %p131 = scmp.eq.s32.totalorder %s20, 3
      %p132 = por %p130, %p131
      %p133 = scmp.ne.s32.totalorder %s122, %s123
      %p134 = scmp.eq.s32.totalorder %s20, 0
      %p135 = por %p133, %p134
      %p136 = scmp.ne.s32.totalorder %s122, %s123
      %p137 = scmp.eq.s32.totalorder %s21, 3
      %p138 = por %p136, %p137
      %p140 = scmp.ne.s32.totalorder %s123, %s139
      %p141 = scmp.eq.s32.totalorder %s21, 0
      %p142 = por %p140, %p141
      %s143 = ssub.s32 %s22, %s34
      %s144 = ssub.s32 %s23, %s30
      %s145 = sor.u32 %s143, %s144
      %p146 = scmp.eq.s32.totalorder %s145, 0
      %s148 = sadd.s32 %s147, 1
      %s149 = scalar_select %p146, %s147, %s148
      %p152 = pneg %p146
      %p153 = scmp.eq.s32.totalorder %s15, 3
      %p154 = por %p152, %p153
      %p155 = scmp.ne.s32.totalorder %s147, %s150
      %p156 = scmp.eq.s32.totalorder %s15, 0
      %p157 = por %p155, %p156
      %p158 = scmp.ne.s32.totalorder %s147, %s150
      %p159 = scmp.eq.s32.totalorder %s20, 3
      %p160 = por %p158, %p159
      %p161 = scmp.ne.s32.totalorder %s150, %s151
      %p162 = scmp.eq.s32.totalorder %s20, 0
      %p163 = por %p161, %p162
      %p164 = scmp.ne.s32.totalorder %s150, %s151
      %p165 = scmp.eq.s32.totalorder %s21, 3
      %p166 = por %p164, %p165
      %p168 = scmp.ne.s32.totalorder %s151, %s167
      %p169 = scmp.eq.s32.totalorder %s21, 0
      %p170 = por %p168, %p169
      %s171 = ssub.s32 %s22, %s34
      %s172 = ssub.s32 %s23, %s30
      %s173 = sor.u32 %s171, %s172
      %p174 = scmp.eq.s32.totalorder %s173, 0
      %s176 = sadd.s32 %s175, 1
      %s177 = scalar_select %p174, %s175, %s176
      %p180 = pneg %p174
      %p181 = scmp.eq.s32.totalorder %s15, 3
      %p182 = por %p180, %p181
      %p183 = scmp.ne.s32.totalorder %s175, %s178
      %p184 = scmp.eq.s32.totalorder %s15, 0
      %p185 = por %p183, %p184
      %p186 = scmp.ne.s32.totalorder %s175, %s178
      %p187 = scmp.eq.s32.totalorder %s20, 3
      %p188 = por %p186, %p187
      %p189 = scmp.ne.s32.totalorder %s178, %s179
      %p190 = scmp.eq.s32.totalorder %s20, 0
      %p191 = por %p189, %p190
      %p192 = scmp.ne.s32.totalorder %s178, %s179
      %p193 = scmp.eq.s32.totalorder %s21, 3
      %p194 = por %p192, %p193
      %p196 = scmp.ne.s32.totalorder %s179, %s195
      %p197 = scmp.eq.s32.totalorder %s21, 0
      %p198 = por %p196, %p197
      %p199 = scmp.le.s32.totalorder 1, %s15
      %p200 = scmp.lt.s32.totalorder %s15, 5
      %p201 = pnand %p199, %p200
      %p202 = pneg %p201
      // Predicated region
      $region9: #{scaled_dot_product_attention.1} parent=5 // pred_check
        _
      $region10: #{scaled_dot_product_attention.1} parent=5 // pred_check_branch
        %204 = sbr.rel (%p201) target = $region12
      $region11: #{scaled_dot_product_attention.1} parent=5 // pred_region
        %s205 = ssub.s32 %s15, 1
      $region12: #{scaled_dot_product_attention.1} parent=5 // pred_fallthru
        _
      %p206 = scmp.lt.s32.totalorder %s15, 4
      // Predicated region
      $region13: #{scaled_dot_product_attention.1} parent=5 // pred_check
        %p207 = pneg %p206
      $region14: #{scaled_dot_product_attention.1} parent=5 // pred_check_branch
        %209 = sbr.rel (%p207) target = $region16
      $region15: #{scaled_dot_product_attention.1} parent=5 // pred_region
        // Predicated region
        $region17: #{scaled_dot_product_attention.1} parent=15 // pred_check
          %p210 = pneg %p49
        $region18: #{scaled_dot_product_attention.1} parent=15 // pred_check_branch
          %212 = sbr.rel (%p210) target = $region20
        $region19: #{scaled_dot_product_attention.1} parent=15 // pred_region
          %s213 = smul.u32 16, %s23
          %p214 = scmp.lt.s32.totalorder %s22, 3
          %s215 = scalar_select %p214, %s22, 3
          %p216 = scmp.lt.s32.totalorder %s213, 15
          %s217 = scalar_select %p216, %s213, 15
          %s218 = smul.addr %s215, 16
          %s219 = sadd.s32 %s217, %s218
          %s220 = smul.addr %s219, 8
          %s221 = scalar_lea.vmem %s0, %s220
          %s222 = smul.u32 16, %s23
        $region20: #{scaled_dot_product_attention.1} parent=15 // pred_fallthru
          _
        // Predicated region
        $region21: #{scaled_dot_product_attention.1} parent=15 // pred_check
          %p223 = pneg %p75
        $region22: #{scaled_dot_product_attention.1} parent=15 // pred_check_branch
          %225 = sbr.rel (%p223) target = $region24
        $region23: #{scaled_dot_product_attention.1} parent=15 // pred_region
          %p226 = scmp.lt.s32.totalorder %s22, 3
          %s227 = scalar_select %p226, %s22, 3
          %s228 = smul.addr %s227, 16
          %s229 = smul.addr %s228, 8
          %s230 = scalar_lea.vmem %s1, %s229
        $region24: #{scaled_dot_product_attention.1} parent=15 // pred_fallthru
          _
        // Predicated region
        $region25: #{scaled_dot_product_attention.1} parent=15 // pred_check
          %p231 = pneg %p101
        $region26: #{scaled_dot_product_attention.1} parent=15 // pred_check_branch
          %233 = sbr.rel (%p231) target = $region28
        $region27: #{scaled_dot_product_attention.1} parent=15 // pred_region
          %p234 = scmp.lt.s32.totalorder %s22, 3
          %s235 = scalar_select %p234, %s22, 3
          %s236 = smul.addr %s235, 16
          %s237 = smul.addr %s236, 8
          %s238 = scalar_lea.vmem %s2, %s237
        $region28: #{scaled_dot_product_attention.1} parent=15 // pred_fallthru
          _
        // Predicated region
        $region29: #{scaled_dot_product_attention.1} parent=15 // pred_check
          %p239 = pneg %p129
        $region30: #{scaled_dot_product_attention.1} parent=15 // pred_check_branch
          %241 = sbr.rel (%p239) target = $region32
        $region31: #{scaled_dot_product_attention.1} parent=15 // pred_region
          %s242 = smul.u32 16, %s23
          %p243 = scmp.lt.s32.totalorder %s22, 3
          %s244 = scalar_select %p243, %s22, 3
          %p245 = scmp.lt.s32.totalorder %s242, 15
          %s246 = scalar_select %p245, %s242, 15
          %s247 = smul.addr %s244, 16
          %s248 = sadd.s32 %s246, %s247
          %s249 = smul.addr %s248, 8
          %s250 = scalar_lea.vmem %s3, %s249
          %s251 = smul.u32 16, %s23
        $region32: #{scaled_dot_product_attention.1} parent=15 // pred_fallthru
          _
      $region16: #{scaled_dot_product_attention.1} parent=5 // pred_fallthru
        _
      %p252 = scmp.le.s32.totalorder 1, %s15
      %p253 = scmp.lt.s32.totalorder %s15, 5
      %p254 = pnand %p252, %p253
      %p255 = pneg %p254
      // Predicated region
      $region33: #{scaled_dot_product_attention.1} parent=5 // pred_check
        _
      $region34: #{scaled_dot_product_attention.1} parent=5 // pred_check_branch
        %257 = sbr.rel (%p254) target = $region36
      $region35: #{scaled_dot_product_attention.1} parent=5 // pred_region
        %s258 = ssub.s32 %s15, 1
        %s259 = smul.u32 16, %s25
        %p260 = scmp.lt.s32.totalorder %s24, 3
        %s261 = scalar_select %p260, %s24, 3
        %p262 = scmp.lt.s32.totalorder %s259, 15
        %s263 = scalar_select %p262, %s259, 15
        %s264 = smul.addr %s261, 16
        %s265 = sadd.s32 %s263, %s264
        %s266 = smul.addr %s265, 8
        %s267 = scalar_lea.vmem %s0, %s266
        %p268 = pneg %p55
        %p269 = pneg %p52
        %p270 = scmp.lt.s32.totalorder %s24, 3
        %s271 = scalar_select %p270, %s24, 3
        %s272 = smul.addr %s271, 16
        %s273 = smul.addr %s272, 8
        %s274 = scalar_lea.vmem %s1, %s273
        %p275 = pneg %p81
        %p276 = pneg %p78
        %p277 = scmp.lt.s32.totalorder %s24, 3
        %s278 = scalar_select %p277, %s24, 3
        %s279 = smul.addr %s278, 16
        %s280 = smul.addr %s279, 8
        %s281 = scalar_lea.vmem %s2, %s280
        %p282 = pneg %p107
        %p283 = pneg %p104
        %s284 = smul.u32 16, %s25
        %p285 = scmp.lt.s32.totalorder %s24, 3
        %s286 = scalar_select %p285, %s24, 3
        %p287 = scmp.lt.s32.totalorder %s284, 15
        %s288 = scalar_select %p287, %s284, 15
        %s289 = smul.addr %s286, 16
        %s290 = sadd.s32 %s288, %s289
        %s291 = smul.addr %s290, 8
        %s292 = scalar_lea.vmem %s3, %s291
        %p293 = pneg %p135
        %p294 = pneg %p132
        %p295 = pneg %p163
        %p296 = pneg %p160
        %s297 = smul.u32 16, %s25
        %p298 = scmp.lt.s32.totalorder %s24, 3
        %s299 = scalar_select %p298, %s24, 3
        %p300 = scmp.lt.s32.totalorder %s297, 15
        %s301 = scalar_select %p300, %s297, 15
        %s302 = smul.addr %s299, 16
        %s303 = sadd.s32 %s301, %s302
        %s304 = smul.addr %s303, 8
        %s305 = scalar_lea.vmem %s4, %s304
        %p306 = pneg %p191
        %p307 = pneg %p188
        %s308 = sand.u32 %s178, 1
        %s309 = scalar_lea.sflag [#allocation3], %s308
        %s310 = sand.u32 %s178, 1
        %s311 = smul.addr %s310, 128
        %s312 = scalar_lea.vmem [#allocation2], %s311
        %s313 = smul.u32 16, %s25
        %p314 = scmp.lt.s32.totalorder %s24, 3
        %s315 = scalar_select %p314, %s24, 3
        %p316 = scmp.lt.s32.totalorder %s313, 15
        %s317 = scalar_select %p316, %s313, 15
        %s318 = smul.addr %s315, 16
        %s319 = sadd.s32 %s317, %s318
        %s320 = smul.addr %s319, 8
        %s321 = scalar_lea.vmem %s0, %s320
        %s322 = smul.u32 16, %s25
        %p323 = scmp.lt.s32.totalorder %s24, 3
        %s324 = scalar_select %p323, %s24, 3
        %s325 = smul.addr %s324, 16
        %s326 = smul.addr %s325, 8
        %s327 = scalar_lea.vmem %s1, %s326
        %p328 = scmp.lt.s32.totalorder %s24, 3
        %s329 = scalar_select %p328, %s24, 3
        %s330 = smul.addr %s329, 16
        %s331 = smul.addr %s330, 8
        %s332 = scalar_lea.vmem %s2, %s331
        %s333 = smul.u32 16, %s25
        %p334 = scmp.lt.s32.totalorder %s24, 3
        %s335 = scalar_select %p334, %s24, 3
        %p336 = scmp.lt.s32.totalorder %s333, 15
        %s337 = scalar_select %p336, %s333, 15
        %s338 = smul.addr %s335, 16
        %s339 = sadd.s32 %s337, %s338
        %s340 = smul.addr %s339, 8
        %s341 = scalar_lea.vmem %s3, %s340
        %s342 = smul.u32 16, %s25
        %s343 = smul.u32 16, %s25
        %p344 = scmp.lt.s32.totalorder %s24, 3
        %s345 = scalar_select %p344, %s24, 3
        %p346 = scmp.lt.s32.totalorder %s343, 15
        %s347 = scalar_select %p346, %s343, 15
        %s348 = smul.addr %s345, 16
        %s349 = sadd.s32 %s347, %s348
        %s350 = smul.addr %s349, 8
        %s351 = scalar_lea.vmem %s4, %s350
        %s352 = smul.u32 16, %s25
        %s353 = smul.u32 16, %s25
        %v355 = vld [vmem:[%s321] sm:$0xff]
        %v356 = vld [vmem:[%s321 + $0x8] sm:$0xff]
        %v357 = vld [vmem:[%s321 + $0x10] sm:$0xff]
        %v358 = vld [vmem:[%s321 + $0x18] sm:$0xff]
        %v359 = vld [vmem:[%s321 + $0x20] sm:$0xff]
        %v360 = vld [vmem:[%s321 + $0x28] sm:$0xff]
        %v361 = vld [vmem:[%s321 + $0x30] sm:$0xff]
        %v362 = vld [vmem:[%s321 + $0x38] sm:$0xff]
        %v363 = vld [vmem:[%s321 + $0x40] sm:$0xff]
        %v364 = vld [vmem:[%s321 + $0x48] sm:$0xff]
        %v365 = vld [vmem:[%s321 + $0x50] sm:$0xff]
        %v366 = vld [vmem:[%s321 + $0x58] sm:$0xff]
        %v367 = vld [vmem:[%s321 + $0x60] sm:$0xff]
        %v368 = vld [vmem:[%s321 + $0x68] sm:$0xff]
        %v369 = vld [vmem:[%s321 + $0x70] sm:$0xff]
        %v370 = vld [vmem:[%s321 + $0x78] sm:$0xff]
        %v371 = vld [vmem:[%s327] sm:$0xff]
        %v372 = vld [vmem:[%s327 + $0x8] sm:$0xff]
        %v373 = vld [vmem:[%s327 + $0x10] sm:$0xff]
        %v374 = vld [vmem:[%s327 + $0x18] sm:$0xff]
        %v375 = vld [vmem:[%s327 + $0x20] sm:$0xff]
        %v376 = vld [vmem:[%s327 + $0x28] sm:$0xff]
        %v377 = vld [vmem:[%s327 + $0x30] sm:$0xff]
        %v378 = vld [vmem:[%s327 + $0x38] sm:$0xff]
        %v379 = vld [vmem:[%s327 + $0x40] sm:$0xff]
        %v380 = vld [vmem:[%s327 + $0x48] sm:$0xff]
        %v381 = vld [vmem:[%s327 + $0x50] sm:$0xff]
        %v382 = vld [vmem:[%s327 + $0x58] sm:$0xff]
        %v383 = vld [vmem:[%s327 + $0x60] sm:$0xff]
        %v384 = vld [vmem:[%s327 + $0x68] sm:$0xff]
        %v385 = vld [vmem:[%s327 + $0x70] sm:$0xff]
        %v386 = vld [vmem:[%s327 + $0x78] sm:$0xff]
        %v387 = vld [vmem:[%s332] sm:$0xff]
        %v388 = vld [vmem:[%s332 + $0x8] sm:$0xff]
        %v389 = vld [vmem:[%s332 + $0x10] sm:$0xff]
        %v390 = vld [vmem:[%s332 + $0x18] sm:$0xff]
        %v391 = vld [vmem:[%s332 + $0x20] sm:$0xff]
        %v392 = vld [vmem:[%s332 + $0x28] sm:$0xff]
        %v393 = vld [vmem:[%s332 + $0x30] sm:$0xff]
        %v394 = vld [vmem:[%s332 + $0x38] sm:$0xff]
        %v395 = vld [vmem:[%s332 + $0x40] sm:$0xff]
        %v396 = vld [vmem:[%s332 + $0x48] sm:$0xff]
        %v397 = vld [vmem:[%s332 + $0x50] sm:$0xff]
        %v398 = vld [vmem:[%s332 + $0x58] sm:$0xff]
        %v399 = vld [vmem:[%s332 + $0x60] sm:$0xff]
        %v400 = vld [vmem:[%s332 + $0x68] sm:$0xff]
        %v401 = vld [vmem:[%s332 + $0x70] sm:$0xff]
        %v402 = vld [vmem:[%s332 + $0x78] sm:$0xff]
        %v403 = vpack.c.bf16 %v356, %v355
        %v404 = vpack.c.bf16 %v358, %v357
        %v405 = vpack.c.bf16 %v360, %v359
        %v406 = vpack.c.bf16 %v362, %v361
        %v407 = vpack.c.bf16 %v364, %v363
        %v408 = vpack.c.bf16 %v366, %v365
        %v409 = vpack.c.bf16 %v368, %v367
        %v410 = vpack.c.bf16 %v370, %v369
        %v411 = vpack.c.bf16 %v372, %v371
        %v412 = vpack.c.bf16 %v374, %v373
        %v413 = vpack.c.bf16 %v376, %v375
        %v414 = vpack.c.bf16 %v378, %v377
        %v415 = vpack.c.bf16 %v380, %v379
        %v416 = vpack.c.bf16 %v382, %v381
        %v417 = vpack.c.bf16 %v384, %v383
        %v418 = vpack.c.bf16 %v386, %v385
        %vm419 = vcmask 523264
        %v421 = vsel %vm419, %v403, 0
        %v424 = vsel %vm419, %v404, 0
        %v427 = vsel %vm419, %v405, 0
        %v430 = vsel %vm419, %v406, 0
        %v433 = vsel %vm419, %v407, 0
        %v436 = vsel %vm419, %v408, 0
        %v439 = vsel %vm419, %v409, 0
        %v442 = vsel %vm419, %v410, 0
        %v445 = vsel %vm419, %v411, 0
        %v448 = vsel %vm419, %v412, 0
        %v451 = vsel %vm419, %v413, 0
        %v454 = vsel %vm419, %v414, 0
        %v457 = vsel %vm419, %v415, 0
        %v460 = vsel %vm419, %v416, 0
        %v463 = vsel %vm419, %v417, 0
        %v466 = vsel %vm419, %v418, 0
        %468 = vmatprep.subr.bf16.mxu0 0
        %469 = vmatpush1.bf16.xpose.msra.mxu0 %v466
        %470 = vmatprep.subr.bf16.mxu0 0
        %471 = vmatpush1.bf16.xpose.msra.mxu0 %v463
        %472 = vmatprep.subr.bf16.mxu0 0
        %473 = vmatpush1.bf16.xpose.msra.mxu0 %v460
        %474 = vmatprep.subr.bf16.mxu0 0
        %475 = vmatpush1.bf16.xpose.msra.mxu0 %v457
        %476 = vmatprep.subr.bf16.mxu0 0
        %477 = vmatpush1.bf16.xpose.msra.mxu0 %v454
        %478 = vmatprep.subr.bf16.mxu0 0
        %479 = vmatpush1.bf16.xpose.msra.mxu0 %v451
        %480 = vmatprep.subr.bf16.mxu0 0
        %481 = vmatpush1.bf16.xpose.msra.mxu0 %v448
        %482 = vmatprep.subr.bf16.mxu0 0
        %483 = vmatpush1.bf16.xpose.msra.mxu0 %v445
        %484 = vmatprep.subr.bf16.mxu0 0
        %485 = vmatpush2.bf16.xpose.msra.mxu0 0
        %486 = vmatprep.subr.bf16.mxu0 0
        %487 = vmatpush2.bf16.xpose.msra.mxu0 0
        %488 = vmatprep.subr.bf16.mxu0 0
        %489 = vmatpush2.bf16.xpose.msra.mxu0 0
        %490 = vmatprep.subr.bf16.mxu0 0
        %491 = vmatpush2.bf16.xpose.msra.mxu0 0
        %492 = vmatprep.subr.bf16.mxu0 0
        %493 = vmatpush2.bf16.xpose.msra.mxu0 0
        %494 = vmatprep.subr.bf16.mxu0 0
        %495 = vmatpush2.bf16.xpose.msra.mxu0 0
        %496 = vmatprep.subr.bf16.mxu0 0
        %497 = vmatpush2.bf16.xpose.msra.mxu0 0
        %498 = vmatprep.subr.bf16.mxu0 0
        %499 = vmatpush2.bf16.xpose.msra.mxu0 0
        %500 = vmatprep.mubr.bf16.mxu0 0
        %501 = vmatmul.mubr.bf16.gmra.mxu0 %v421
        %v502 = vpop.f32.mrf.mxu0
        %v503 = vadd.f32 0.0, %v502
        %v504 = vpop.f32.mrf.mxu0
        %v505 = vpop.f32.mrf.mxu0
        %v506 = vadd.f32 0.0, %v505
        %v507 = vpop.f32.mrf.mxu0
        %508 = vmatprep.mubr.bf16.mxu0 0
        %509 = vmatmul.mubr.bf16.gmra.mxu0 %v424
        %v510 = vpop.f32.mrf.mxu0
        %v511 = vadd.f32 0.0, %v510
        %v512 = vpop.f32.mrf.mxu0
        %v513 = vpop.f32.mrf.mxu0
        %v514 = vadd.f32 0.0, %v513
        %v515 = vpop.f32.mrf.mxu0
        %516 = vmatprep.mubr.bf16.mxu0 0
        %517 = vmatmul.mubr.bf16.gmra.mxu0 %v427
        %v518 = vpop.f32.mrf.mxu0
        %v519 = vadd.f32 0.0, %v518
        %v520 = vpop.f32.mrf.mxu0
        %v521 = vpop.f32.mrf.mxu0
        %v522 = vadd.f32 0.0, %v521
        %v523 = vpop.f32.mrf.mxu0
        %524 = vmatprep.mubr.bf16.mxu0 0
        %525 = vmatmul.mubr.bf16.gmra.mxu0 %v430
        %v526 = vpop.f32.mrf.mxu0
        %v527 = vadd.f32 0.0, %v526
        %v528 = vpop.f32.mrf.mxu0
        %v529 = vpop.f32.mrf.mxu0
        %v530 = vadd.f32 0.0, %v529
        %v531 = vpop.f32.mrf.mxu0
        %532 = vmatprep.mubr.bf16.mxu0 0
        %533 = vmatmul.mubr.bf16.gmra.mxu0 %v433
        %v534 = vpop.f32.mrf.mxu0
        %v535 = vadd.f32 0.0, %v534
        %v536 = vpop.f32.mrf.mxu0
        %v537 = vpop.f32.mrf.mxu0
        %v538 = vadd.f32 0.0, %v537
        %v539 = vpop.f32.mrf.mxu0
        %540 = vmatprep.mubr.bf16.mxu0 0
        %541 = vmatmul.mubr.bf16.gmra.mxu0 %v436
        %v542 = vpop.f32.mrf.mxu0
        %v543 = vadd.f32 0.0, %v542
        %v544 = vpop.f32.mrf.mxu0
        %v545 = vpop.f32.mrf.mxu0
        %v546 = vadd.f32 0.0, %v545
        %v547 = vpop.f32.mrf.mxu0
        %548 = vmatprep.mubr.bf16.mxu0 0
        %549 = vmatmul.mubr.bf16.gmra.mxu0 %v439
        %v550 = vpop.f32.mrf.mxu0
        %v551 = vadd.f32 0.0, %v550
        %v552 = vpop.f32.mrf.mxu0
        %v553 = vpop.f32.mrf.mxu0
        %v554 = vadd.f32 0.0, %v553
        %v555 = vpop.f32.mrf.mxu0
        %556 = vmatprep.mubr.bf16.mxu0 0
        %557 = vmatmul.mubr.bf16.gmra.mxu0 %v442
        %v558 = vpop.f32.mrf.mxu0
        %v559 = vadd.f32 0.0, %v558
        %v560 = vpop.f32.mrf.mxu0
        %v561 = vpop.f32.mrf.mxu0
        %v562 = vadd.f32 0.0, %v561
        %v563 = vpop.f32.mrf.mxu0
        %564 = vdwg.mxu0
        %v565 = vmul.f32 %v503, 0.125
        %v566 = vmul.f32 %v506, 0.125
        %v567 = vmul.f32 %v511, 0.125
        %v568 = vmul.f32 %v514, 0.125
        %v569 = vmul.f32 %v519, 0.125
        %v570 = vmul.f32 %v522, 0.125
        %v571 = vmul.f32 %v527, 0.125
        %v572 = vmul.f32 %v530, 0.125
        %v573 = vmul.f32 %v535, 0.125
        %v574 = vmul.f32 %v538, 0.125
        %v575 = vmul.f32 %v543, 0.125
        %v576 = vmul.f32 %v546, 0.125
        %v577 = vmul.f32 %v551, 0.125
        %v578 = vmul.f32 %v554, 0.125
        %v579 = vmul.f32 %v559, 0.125
        %v580 = vmul.f32 %v562, 0.125
        %v581 = vld [vmem:[%s341] sm:$0xff]
        %v582 = vld [vmem:[%s341 + $0x8] sm:$0xff]
        %v583 = vld [vmem:[%s341 + $0x10] sm:$0xff]
        %v584 = vld [vmem:[%s341 + $0x18] sm:$0xff]
        %v585 = vld [vmem:[%s341 + $0x20] sm:$0xff]
        %v586 = vld [vmem:[%s341 + $0x28] sm:$0xff]
        %v587 = vld [vmem:[%s341 + $0x30] sm:$0xff]
        %v588 = vld [vmem:[%s341 + $0x38] sm:$0xff]
        %v589 = vld [vmem:[%s341 + $0x40] sm:$0xff]
        %v590 = vld [vmem:[%s341 + $0x48] sm:$0xff]
        %v591 = vld [vmem:[%s341 + $0x50] sm:$0xff]
        %v592 = vld [vmem:[%s341 + $0x58] sm:$0xff]
        %v593 = vld [vmem:[%s341 + $0x60] sm:$0xff]
        %v594 = vld [vmem:[%s341 + $0x68] sm:$0xff]
        %v595 = vld [vmem:[%s341 + $0x70] sm:$0xff]
        %v596 = vld [vmem:[%s341 + $0x78] sm:$0xff]
        %vm597 = vcmp.ne.s32.totalorder %v581, 0
        %vm598 = vcmp.ne.s32.totalorder %v582, 0
        %vm599 = vcmp.ne.s32.totalorder %v583, 0
        %vm600 = vcmp.ne.s32.totalorder %v584, 0
        %vm601 = vcmp.ne.s32.totalorder %v585, 0
        %vm602 = vcmp.ne.s32.totalorder %v586, 0
        %vm603 = vcmp.ne.s32.totalorder %v587, 0
        %vm604 = vcmp.ne.s32.totalorder %v588, 0
        %vm605 = vcmp.ne.s32.totalorder %v589, 0
        %vm606 = vcmp.ne.s32.totalorder %v590, 0
        %vm607 = vcmp.ne.s32.totalorder %v591, 0
        %vm608 = vcmp.ne.s32.totalorder %v592, 0
        %vm609 = vcmp.ne.s32.totalorder %v593, 0
        %vm610 = vcmp.ne.s32.totalorder %v594, 0
        %vm611 = vcmp.ne.s32.totalorder %v595, 0
        %vm612 = vcmp.ne.s32.totalorder %v596, 0
        %v613 = vsel %vm597, -1e+09, %v565
        %v614 = vsel %vm598, -1e+09, %v566
        %v615 = vsel %vm599, -1e+09, %v567
        %v616 = vsel %vm600, -1e+09, %v568
        %v617 = vsel %vm601, -1e+09, %v569
        %v618 = vsel %vm602, -1e+09, %v570
        %v619 = vsel %vm603, -1e+09, %v571
        %v620 = vsel %vm604, -1e+09, %v572
        %v621 = vsel %vm605, -1e+09, %v573
        %v622 = vsel %vm606, -1e+09, %v574
        %v623 = vsel %vm607, -1e+09, %v575
        %v624 = vsel %vm608, -1e+09, %v576
        %v625 = vsel %vm609, -1e+09, %v577
        %v626 = vsel %vm610, -1e+09, %v578
        %v627 = vsel %vm611, -1e+09, %v579
        %v628 = vsel %vm612, -1e+09, %v580
        %629 = vmax.xlane.f32.xlu0 %v613
        %v630 = vpop.xlane.xlu0 %629
        %631 = vmax.xlane.f32.xlu0 %v614
        %v632 = vpop.xlane.xlu0 %631
        %633 = vmax.xlane.f32.xlu0 %v615
        %v634 = vpop.xlane.xlu0 %633
        %635 = vmax.xlane.f32.xlu0 %v616
        %v636 = vpop.xlane.xlu0 %635
        %637 = vmax.xlane.f32.xlu0 %v617
        %v638 = vpop.xlane.xlu0 %637
        %639 = vmax.xlane.f32.xlu0 %v618
        %v640 = vpop.xlane.xlu0 %639
        %641 = vmax.xlane.f32.xlu0 %v619
        %v642 = vpop.xlane.xlu0 %641
        %643 = vmax.xlane.f32.xlu0 %v620
        %v644 = vpop.xlane.xlu0 %643
        %645 = vmax.xlane.f32.xlu0 %v621
        %v646 = vpop.xlane.xlu0 %645
        %647 = vmax.xlane.f32.xlu0 %v622
        %v648 = vpop.xlane.xlu0 %647
        %649 = vmax.xlane.f32.xlu0 %v623
        %v650 = vpop.xlane.xlu0 %649
        %651 = vmax.xlane.f32.xlu0 %v624
        %v652 = vpop.xlane.xlu0 %651
        %653 = vmax.xlane.f32.xlu0 %v625
        %v654 = vpop.xlane.xlu0 %653
        %655 = vmax.xlane.f32.xlu0 %v626
        %v656 = vpop.xlane.xlu0 %655
        %657 = vmax.xlane.f32.xlu0 %v627
        %v658 = vpop.xlane.xlu0 %657
        %659 = vmax.xlane.f32.xlu0 %v628
        %v660 = vpop.xlane.xlu0 %659
        %v661 = vsub.f32 %v613, %v630
        %v662 = vsub.f32 %v614, %v632
        %v663 = vsub.f32 %v615, %v634
        %v664 = vsub.f32 %v616, %v636
        %v665 = vsub.f32 %v617, %v638
        %v666 = vsub.f32 %v618, %v640
        %v667 = vsub.f32 %v619, %v642
        %v668 = vsub.f32 %v620, %v644
        %v669 = vsub.f32 %v621, %v646
        %v670 = vsub.f32 %v622, %v648
        %v671 = vsub.f32 %v623, %v650
        %v672 = vsub.f32 %v624, %v652
        %v673 = vsub.f32 %v625, %v654
        %v674 = vsub.f32 %v626, %v656
        %v675 = vsub.f32 %v627, %v658
        %v676 = vsub.f32 %v628, %v660
        %v677 = vmul.f32 %v661, 1.442695
        %v678 = vpow.pop %v677
        %v679 = vmul.f32 %v662, 1.442695
        %v680 = vpow.pop %v679
        %v681 = vmul.f32 %v663, 1.442695
        %v682 = vpow.pop %v681
        %v683 = vmul.f32 %v664, 1.442695
        %v684 = vpow.pop %v683
        %v685 = vmul.f32 %v665, 1.442695
        %v686 = vpow.pop %v685
        %v687 = vmul.f32 %v666, 1.442695
        %v688 = vpow.pop %v687
        %v689 = vmul.f32 %v667, 1.442695
        %v690 = vpow.pop %v689
        %v691 = vmul.f32 %v668, 1.442695
        %v692 = vpow.pop %v691
        %v693 = vmul.f32 %v669, 1.442695
        %v694 = vpow.pop %v693
        %v695 = vmul.f32 %v670, 1.442695
        %v696 = vpow.pop %v695
        %v697 = vmul.f32 %v671, 1.442695
        %v698 = vpow.pop %v697
        %v699 = vmul.f32 %v672, 1.442695
        %v700 = vpow.pop %v699
        %v701 = vmul.f32 %v673, 1.442695
        %v702 = vpow.pop %v701
        %v703 = vmul.f32 %v674, 1.442695
        %v704 = vpow.pop %v703
        %v705 = vmul.f32 %v675, 1.442695
        %v706 = vpow.pop %v705
        %v707 = vmul.f32 %v676, 1.442695
        %v708 = vpow.pop %v707
        %709 = vadd.xlane.f32.xlu0 %v678
        %v710 = vpop.xlane.xlu0 %709
        %711 = vadd.xlane.f32.xlu0 %v680
        %v712 = vpop.xlane.xlu0 %711
        %713 = vadd.xlane.f32.xlu0 %v682
        %v714 = vpop.xlane.xlu0 %713
        %715 = vadd.xlane.f32.xlu0 %v684
        %v716 = vpop.xlane.xlu0 %715
        %717 = vadd.xlane.f32.xlu0 %v686
        %v718 = vpop.xlane.xlu0 %717
        %719 = vadd.xlane.f32.xlu0 %v688
        %v720 = vpop.xlane.xlu0 %719
        %721 = vadd.xlane.f32.xlu0 %v690
        %v722 = vpop.xlane.xlu0 %721
        %723 = vadd.xlane.f32.xlu0 %v692
        %v724 = vpop.xlane.xlu0 %723
        %725 = vadd.xlane.f32.xlu0 %v694
        %v726 = vpop.xlane.xlu0 %725
        %727 = vadd.xlane.f32.xlu0 %v696
        %v728 = vpop.xlane.xlu0 %727
        %729 = vadd.xlane.f32.xlu0 %v698
        %v730 = vpop.xlane.xlu0 %729
        %731 = vadd.xlane.f32.xlu0 %v700
        %v732 = vpop.xlane.xlu0 %731
        %733 = vadd.xlane.f32.xlu0 %v702
        %v734 = vpop.xlane.xlu0 %733
        %735 = vadd.xlane.f32.xlu0 %v704
        %v736 = vpop.xlane.xlu0 %735
        %737 = vadd.xlane.f32.xlu0 %v706
        %v738 = vpop.xlane.xlu0 %737
        %739 = vadd.xlane.f32.xlu0 %v708
        %v740 = vpop.xlane.xlu0 %739
        %v741 = vrcp.pop %v710
        %v742 = vrcp.pop %v712
        %v743 = vrcp.pop %v714
        %v744 = vrcp.pop %v716
        %v745 = vrcp.pop %v718
        %v746 = vrcp.pop %v720
        %v747 = vrcp.pop %v722
        %v748 = vrcp.pop %v724
        %v749 = vrcp.pop %v726
        %v750 = vrcp.pop %v728
        %v751 = vrcp.pop %v730
        %v752 = vrcp.pop %v732
        %v753 = vrcp.pop %v734
        %v754 = vrcp.pop %v736
        %v755 = vrcp.pop %v738
        %v756 = vrcp.pop %v740
        %v757 = vmul.f32 %v678, %v741
        %v758 = vmul.f32 %v680, %v742
        %v759 = vmul.f32 %v682, %v743
        %v760 = vmul.f32 %v684, %v744
        %v761 = vmul.f32 %v686, %v745
        %v762 = vmul.f32 %v688, %v746
        %v763 = vmul.f32 %v690, %v747
        %v764 = vmul.f32 %v692, %v748
        %v765 = vmul.f32 %v694, %v749
        %v766 = vmul.f32 %v696, %v750
        %v767 = vmul.f32 %v698, %v751
        %v768 = vmul.f32 %v700, %v752
        %v769 = vmul.f32 %v702, %v753
        %v770 = vmul.f32 %v704, %v754
        %v771 = vmul.f32 %v706, %v755
        %v772 = vmul.f32 %v708, %v756
        %v773 = vpack.c.bf16 %v758, %v757
        %v774 = vpack.c.bf16 %v760, %v759
        %v775 = vpack.c.bf16 %v762, %v761
        %v776 = vpack.c.bf16 %v764, %v763
        %v777 = vpack.c.bf16 %v766, %v765
        %v778 = vpack.c.bf16 %v768, %v767
        %v779 = vpack.c.bf16 %v770, %v769
        %v780 = vpack.c.bf16 %v772, %v771
        %v781 = vpack.c.bf16 %v388, %v387
        %v782 = vpack.c.bf16 %v390, %v389
        %v783 = vpack.c.bf16 %v392, %v391
        %v784 = vpack.c.bf16 %v394, %v393
        %v785 = vpack.c.bf16 %v396, %v395
        %v786 = vpack.c.bf16 %v398, %v397
        %v787 = vpack.c.bf16 %v400, %v399
        %v788 = vpack.c.bf16 %v402, %v401
        %789 = vmatprep.subr.bf16.mxu0 0
        %790 = vmatpush1.bf16.msra.mxu0 %v788
        %791 = vmatprep.subr.bf16.mxu0 0
        %792 = vmatpush1.bf16.msra.mxu0 %v787
        %793 = vmatprep.subr.bf16.mxu0 0
        %794 = vmatpush1.bf16.msra.mxu0 %v786
        %795 = vmatprep.subr.bf16.mxu0 0
        %796 = vmatpush1.bf16.msra.mxu0 %v785
        %797 = vmatprep.subr.bf16.mxu0 0
        %798 = vmatpush1.bf16.msra.mxu0 %v784
        %799 = vmatprep.subr.bf16.mxu0 0
        %800 = vmatpush1.bf16.msra.mxu0 %v783
        %801 = vmatprep.subr.bf16.mxu0 0
        %802 = vmatpush1.bf16.msra.mxu0 %v782
        %803 = vmatprep.subr.bf16.mxu0 0
        %804 = vmatpush1.bf16.msra.mxu0 %v781
        %805 = vmatprep.subr.bf16.mxu0 0
        %806 = vmatpush2.bf16.msra.mxu0 0
        %807 = vmatprep.subr.bf16.mxu0 0
        %808 = vmatpush2.bf16.msra.mxu0 0
        %809 = vmatprep.subr.bf16.mxu0 0
        %810 = vmatpush2.bf16.msra.mxu0 0
        %811 = vmatprep.subr.bf16.mxu0 0
        %812 = vmatpush2.bf16.msra.mxu0 0
        %813 = vmatprep.subr.bf16.mxu0 0
        %814 = vmatpush2.bf16.msra.mxu0 0
        %815 = vmatprep.subr.bf16.mxu0 0
        %816 = vmatpush2.bf16.msra.mxu0 0
        %817 = vmatprep.subr.bf16.mxu0 0
        %818 = vmatpush2.bf16.msra.mxu0 0
        %819 = vmatprep.subr.bf16.mxu0 0
        %820 = vmatpush2.bf16.msra.mxu0 0
        %821 = vmatprep.mubr.bf16.mxu0 0
        %822 = vmatmul.mubr.bf16.gmra.mxu0 %v773
        %v823 = vpop.f32.mrf.mxu0
        %v824 = vadd.f32 0.0, %v823
        %v825 = vpop.f32.mrf.mxu0
        %v826 = vpop.f32.mrf.mxu0
        %v827 = vadd.f32 0.0, %v826
        %v828 = vpop.f32.mrf.mxu0
        %829 = vmatprep.mubr.bf16.mxu0 0
        %830 = vmatmul.mubr.bf16.gmra.mxu0 %v774
        %v831 = vpop.f32.mrf.mxu0
        %v832 = vadd.f32 0.0, %v831
        %v833 = vpop.f32.mrf.mxu0
        %v834 = vpop.f32.mrf.mxu0
        %v835 = vadd.f32 0.0, %v834
        %v836 = vpop.f32.mrf.mxu0
        %837 = vmatprep.mubr.bf16.mxu0 0
        %838 = vmatmul.mubr.bf16.gmra.mxu0 %v775
        %v839 = vpop.f32.mrf.mxu0
        %v840 = vadd.f32 0.0, %v839
        %v841 = vpop.f32.mrf.mxu0
        %v842 = vpop.f32.mrf.mxu0
        %v843 = vadd.f32 0.0, %v842
        %v844 = vpop.f32.mrf.mxu0
        %845 = vmatprep.mubr.bf16.mxu0 0
        %846 = vmatmul.mubr.bf16.gmra.mxu0 %v776
        %v847 = vpop.f32.mrf.mxu0
        %v848 = vadd.f32 0.0, %v847
        %v849 = vpop.f32.mrf.mxu0
        %v850 = vpop.f32.mrf.mxu0
        %v851 = vadd.f32 0.0, %v850
        %v852 = vpop.f32.mrf.mxu0
        %853 = vmatprep.mubr.bf16.mxu0 0
        %854 = vmatmul.mubr.bf16.gmra.mxu0 %v777
        %v855 = vpop.f32.mrf.mxu0
        %v856 = vadd.f32 0.0, %v855
        %v857 = vpop.f32.mrf.mxu0
        %v858 = vpop.f32.mrf.mxu0
        %v859 = vadd.f32 0.0, %v858
        %v860 = vpop.f32.mrf.mxu0
        %861 = vmatprep.mubr.bf16.mxu0 0
        %862 = vmatmul.mubr.bf16.gmra.mxu0 %v778
        %v863 = vpop.f32.mrf.mxu0
        %v864 = vadd.f32 0.0, %v863
        %v865 = vpop.f32.mrf.mxu0
        %v866 = vpop.f32.mrf.mxu0
        %v867 = vadd.f32 0.0, %v866
        %v868 = vpop.f32.mrf.mxu0
        %869 = vmatprep.mubr.bf16.mxu0 0
        %870 = vmatmul.mubr.bf16.gmra.mxu0 %v779
        %v871 = vpop.f32.mrf.mxu0
        %v872 = vadd.f32 0.0, %v871
        %v873 = vpop.f32.mrf.mxu0
        %v874 = vpop.f32.mrf.mxu0
        %v875 = vadd.f32 0.0, %v874
        %v876 = vpop.f32.mrf.mxu0
        %877 = vmatprep.mubr.bf16.mxu0 0
        %878 = vmatmul.mubr.bf16.gmra.mxu0 %v780
        %v879 = vpop.f32.mrf.mxu0
        %v880 = vadd.f32 0.0, %v879
        %v881 = vpop.f32.mrf.mxu0
        %v882 = vpop.f32.mrf.mxu0
        %v883 = vadd.f32 0.0, %v882
        %v884 = vpop.f32.mrf.mxu0
        %885 = vdwg.mxu0
        %886 = vst [vmem:[%s312] sm:$0xff] %v757
        %887 = vst [vmem:[%s312 + $0x8] sm:$0xff] %v758
        %888 = vst [vmem:[%s312 + $0x10] sm:$0xff] %v759
        %889 = vst [vmem:[%s312 + $0x18] sm:$0xff] %v760
        %890 = vst [vmem:[%s312 + $0x20] sm:$0xff] %v761
        %891 = vst [vmem:[%s312 + $0x28] sm:$0xff] %v762
        %892 = vst [vmem:[%s312 + $0x30] sm:$0xff] %v763
        %893 = vst [vmem:[%s312 + $0x38] sm:$0xff] %v764
        %894 = vst [vmem:[%s312 + $0x40] sm:$0xff] %v765
        %895 = vst [vmem:[%s312 + $0x48] sm:$0xff] %v766
        %896 = vst [vmem:[%s312 + $0x50] sm:$0xff] %v767
        %897 = vst [vmem:[%s312 + $0x58] sm:$0xff] %v768
        %898 = vst [vmem:[%s312 + $0x60] sm:$0xff] %v769
        %899 = vst [vmem:[%s312 + $0x68] sm:$0xff] %v770
        %900 = vst [vmem:[%s312 + $0x70] sm:$0xff] %v771
        %901 = vst [vmem:[%s312 + $0x78] sm:$0xff] %v772
        %902 = vst.msk [vmem:[%s351] sm:$0xff] %vm419, %v824
        %903 = vst.msk [vmem:[%s351 + $0x8] sm:$0xff] %vm419, %v827
        %904 = vst.msk [vmem:[%s351 + $0x10] sm:$0xff] %vm419, %v832
        %905 = vst.msk [vmem:[%s351 + $0x18] sm:$0xff] %vm419, %v835
        %906 = vst.msk [vmem:[%s351 + $0x20] sm:$0xff] %vm419, %v840
        %907 = vst.msk [vmem:[%s351 + $0x28] sm:$0xff] %vm419, %v843
        %908 = vst.msk [vmem:[%s351 + $0x30] sm:$0xff] %vm419, %v848
        %909 = vst.msk [vmem:[%s351 + $0x38] sm:$0xff] %vm419, %v851
        %910 = vst.msk [vmem:[%s351 + $0x40] sm:$0xff] %vm419, %v856
        %911 = vst.msk [vmem:[%s351 + $0x48] sm:$0xff] %vm419, %v859
        %912 = vst.msk [vmem:[%s351 + $0x50] sm:$0xff] %vm419, %v864
        %913 = vst.msk [vmem:[%s351 + $0x58] sm:$0xff] %vm419, %v867
        %914 = vst.msk [vmem:[%s351 + $0x60] sm:$0xff] %vm419, %v872
        %915 = vst.msk [vmem:[%s351 + $0x68] sm:$0xff] %vm419, %v875
        %916 = vst.msk [vmem:[%s351 + $0x70] sm:$0xff] %vm419, %v880
        %917 = vst.msk [vmem:[%s351 + $0x78] sm:$0xff] %vm419, %v883
        %s918 = smul.u32 16, %s25
        %p919 = scmp.lt.s32.totalorder %s24, 3
        %s920 = scalar_select %p919, %s24, 3
        %p921 = scmp.lt.s32.totalorder %s918, 15
        %s922 = scalar_select %p921, %s918, 15
        %s923 = smul.addr %s920, 16
        %s924 = sadd.s32 %s922, %s923
        %s925 = smul.addr %s924, 8
        %s926 = scalar_lea.vmem %s4, %s925
        %s927 = sand.u32 %s178, 1
        %s928 = scalar_lea.sflag [#allocation3], %s927
        %s929 = sand.u32 %s178, 1
        %s930 = smul.addr %s929, 128
        %s931 = scalar_lea.vmem [#allocation2], %s930
        // Predicated region
        $region37: #{scaled_dot_product_attention.1} parent=35 // pred_check
          %p932 = pneg %p160
        $region38: #{scaled_dot_product_attention.1} parent=35 // pred_check_branch
          %934 = sbr.rel (%p932) target = $region40
        $region39: #{scaled_dot_product_attention.1} parent=35 // pred_region
          %s935 = smul.u32 16, %s25
        $region40: #{scaled_dot_product_attention.1} parent=35 // pred_fallthru
          _
        // Predicated region
        $region41: #{scaled_dot_product_attention.1} parent=35 // pred_check
          %p936 = pneg %p188
        $region42: #{scaled_dot_product_attention.1} parent=35 // pred_check_branch
          %938 = sbr.rel (%p936) target = $region44
        $region43: #{scaled_dot_product_attention.1} parent=35 // pred_region
          %s939 = smul.u32 16, %s25
          %s941 = ssub.s32 2048, 2048
          %942 = vsyncadd %s928, %s941
          %s943 = smul.addr %s24, 16
          %s944 = sadd.s32 %s939, %s943
          %s945 = smul.addr %s944, 128
          %s946 = scalar_lea.hbm %s5, %s945
          %s947 = sshll.u32 %s931, 4
          %s948 = int_to_ptr.vmem [resolvable:$true] %s947
          %953 = dma.vmem_to_hbm [thread:$0]  %s948, 2048, %s946, %s928, 128, 128, 8
        $region44: #{scaled_dot_product_attention.1} parent=35 // pred_fallthru
          _
      $region36: #{scaled_dot_product_attention.1} parent=5 // pred_fallthru
        _
      %p954 = scmp.le.s32.totalorder 2, %s15
      // Predicated region
      $region45: #{scaled_dot_product_attention.1} parent=5 // pred_check
        %p955 = pneg %p954
      $region46: #{scaled_dot_product_attention.1} parent=5 // pred_check_branch
        %957 = sbr.rel (%p955) target = $region48
      $region47: #{scaled_dot_product_attention.1} parent=5 // pred_region
        %s958 = ssub.s32 %s15, 2
        // Predicated region
        $region49: #{scaled_dot_product_attention.1} parent=47 // pred_check
          %p959 = pneg %p166
        $region50: #{scaled_dot_product_attention.1} parent=47 // pred_check_branch
          %961 = sbr.rel (%p959) target = $region52
        $region51: #{scaled_dot_product_attention.1} parent=47 // pred_region
          %s962 = smul.u32 16, %s27
          %p963 = scmp.lt.s32.totalorder %s26, 3
          %s964 = scalar_select %p963, %s26, 3
          %p965 = scmp.lt.s32.totalorder %s962, 15
          %s966 = scalar_select %p965, %s962, 15
          %s967 = smul.addr %s964, 16
          %s968 = sadd.s32 %s966, %s967
          %s969 = smul.addr %s968, 8
          %s970 = scalar_lea.vmem %s4, %s969
        $region52: #{scaled_dot_product_attention.1} parent=47 // pred_fallthru
          _
        // Predicated region
        $region53: #{scaled_dot_product_attention.1} parent=47 // pred_check
          %p971 = pneg %p194
        $region54: #{scaled_dot_product_attention.1} parent=47 // pred_check_branch
          %973 = sbr.rel (%p971) target = $region56
        $region55: #{scaled_dot_product_attention.1} parent=47 // pred_region
          %s974 = sand.u32 %s179, 1
          %s975 = scalar_lea.sflag [#allocation3], %s974
          %s976 = sand.u32 %s179, 1
          %s977 = smul.addr %s976, 128
          %s978 = scalar_lea.vmem [#allocation2], %s977
          %979 = dma.done %s975, 2048
        $region56: #{scaled_dot_product_attention.1} parent=47 // pred_fallthru
          _
      $region48: #{scaled_dot_product_attention.1} parent=5 // pred_fallthru
        _
    $region6: #{scaled_dot_product_attention.1} parent=1 // loop_footer
      %s19 = sadd.s32 1, %s15
    $region7: #{scaled_dot_product_attention.1} parent=1 // loop_footer_branch
      %14 = sbr.rel target = $region3
    $region8: #{scaled_dot_product_attention.1} parent=1 // loop_exit
      _
    %980 = vsyncpa [#allocation3], 1
    %s981 = scalar_lea.sflag [#allocation3], 1
    %982 = vsyncpa %s981, 1

</llo_original>
